<compile_context>
chip_gen: v7x
topology: tpu7x:2x2x1
jax: 0.10.0
libtpu: 0.0.40
codegen_flags: <defaults>
</compile_context>

<pallas_src>
import numpy as np
import jax
import jax.numpy as jnp
from jax.experimental import pallas as pl
from jax.experimental.pallas import tpu as pltpu


def rnn_seq_kernel(xs_ref, h0_ref, wxh_ref, whh_ref, wxo_ref, who_ref,
                   bh_ref, bo_ref, out_ref, hfin_ref, hstack_ref):
    TB, _ = out_ref.shape
    B, H = hfin_ref.shape
    T = TB // B
    cd = whh_ref.dtype                      # MXU operand dtype (f32 or bf16)

    xs = xs_ref[...]                        # (T*B, I), compute dtype

    # --- Phase A (batched): input->hidden projection for ALL timesteps at once.
    xh = (jnp.dot(xs, wxh_ref[...], preferred_element_type=jnp.float32)
          + bh_ref[...])                    # (T*B, H) f32

    # --- Phase B (serial): only h @ W_hh remains on the critical path.
    #     Static T -> fully unrolled straight-line code; incoming h_t of every
    #     step is stashed in VMEM for the batched output projection.
    w_hh = whh_ref[...]
    h = h0_ref[...]                         # (B, H) f32 carry
    for t in range(T):
        hstack_ref[t * B:(t + 1) * B, :] = h.astype(cd)
        h = xh[t * B:(t + 1) * B, :] + jnp.dot(
            h.astype(cd), w_hh, preferred_element_type=jnp.float32)
    hfin_ref[...] = h

    # --- Phase C (batched): output projection + log-softmax for ALL timesteps.
    logits = (jnp.dot(xs, wxo_ref[...], preferred_element_type=jnp.float32)
              + jnp.dot(hstack_ref[...], who_ref[...],
                        preferred_element_type=jnp.float32)
              + bo_ref[...])                # (T*B, O) f32
    m = jnp.max(logits, axis=-1, keepdims=True)
    lse = m + jnp.log(jnp.sum(jnp.exp(logits - m), axis=-1, keepdims=True))
    out_ref[...] = (logits - lse).astype(out_ref.dtype)


@jax.jit
def rnn_forward_sequence(xs, h0, params):
    """Run the RNN cell over xs[T, B, I] starting from h0[B, H].

    Returns (log_probs[T, B, O], final_hidden[B, H]); each per-step pair matches
    RNN.forward(x_t, h_t) of the PyTorch module.
    """
    w_xh, w_hh, w_xo, w_ho, b_h, b_o = params
    T, B, I = xs.shape
    H = w_hh.shape[0]
    O = w_xo.shape[1]
    cd = w_xh.dtype

    # Free row-major reshape (no copy); dtype cast only (halves DMA when bf16).
    xs2 = xs.reshape(T * B, I).astype(cd)

    out2, hfin = pl.pallas_call(
        rnn_seq_kernel,
        out_shape=(jax.ShapeDtypeStruct((T * B, O), jnp.float32),
                   jax.ShapeDtypeStruct((B, H), jnp.float32)),
        scratch_shapes=[pltpu.VMEM((T * B, H), cd)],   # stack of incoming hiddens
    )(xs2, h0.astype(jnp.float32), w_xh, w_hh, w_xo, w_ho, b_h, b_o)

    return out2.reshape(T, B, O), hfin


def rnn_forward(x, h, params):
    """Single-step forward: exactly RNN.forward(input, hidden) -> (log_probs, hidden)."""
    out, h_new = rnn_forward_sequence(x[None], h, params)
    return out[0], h_new


def init_params(key, input_size, hidden_size, output_size):
    """nn.Linear-style uniform(-1/sqrt(fan_in), 1/sqrt(fan_in)); weights stored
    pre-transposed as [in_features, out_features]."""
    c = input_size + hidden_size
    k1, k2, k3, k4 = jax.random.split(key, 4)
    bound = 1.0 / np.sqrt(np.float32(c))
    w_i2h = jax.random.uniform(k1, (c, hidden_size), jnp.float32, -bound, bound)
    b_i2h = jax.random.uniform(k2, (hidden_size,), jnp.float32, -bound, bound)
    w_i2o = jax.random.uniform(k3, (c, output_size), jnp.float32, -bound, bound)
    b_i2o = jax.random.uniform(k4, (output_size,), jnp.float32, -bound, bound)
    return w_i2h, b_i2h, w_i2o, b_i2o


def prepare_params(raw_params, input_size, dtype=jnp.float32):
    """Split the i2h / i2o weights into x-part and h-part (removes the runtime
    concat: x@W_x + h@W_h == cat(x,h)@W). Weights are cast once to the MXU
    operand dtype; biases stay f32 as (1, ·) rows (broadcast in-kernel)."""
    w_i2h, b_i2h, w_i2o, b_i2o = raw_params
    I = input_size
    w_xh = w_i2h[:I].astype(dtype)
    w_hh = w_i2h[I:].astype(dtype)
    w_xo = w_i2o[:I].astype(dtype)
    w_ho = w_i2o[I:].astype(dtype)
    b_h = b_i2h[None, :].astype(jnp.float32)
    b_o = b_i2o[None, :].astype(jnp.float32)
    return w_xh, w_hh, w_xo, w_ho, b_h, b_o


def rnn_reference(xs, h0, raw_params):
    """Pure numpy (f64) reference of the unrolled PyTorch forward."""
    w_i2h, b_i2h, w_i2o, b_i2o = [np.asarray(p, np.float64) for p in raw_params]
    h = np.asarray(h0, np.float64)
    outs = []
    for t in range(xs.shape[0]):
        comb = np.concatenate([np.asarray(xs[t], np.float64), h], axis=1)
        h_new = comb @ w_i2h + b_i2h
        logits = comb @ w_i2o + b_i2o
        m = logits.max(axis=1, keepdims=True)
        lse = m + np.log(np.exp(logits - m).sum(axis=1, keepdims=True))
        outs.append(logits - lse)
        h = h_new
    return np.stack(outs), h


if __name__ == "__main__":
    input_size, hidden_size, output_size = 16, 32, 8
    batch, seq_len = 2, 8

    key = jax.random.PRNGKey(0)
    kp, kx = jax.random.split(key)
    raw_params = init_params(kp, input_size, hidden_size, output_size)

    xs = jax.random.normal(kx, (seq_len, batch, input_size), jnp.float32)
    h0 = jnp.zeros((batch, hidden_size), jnp.float32)   # initHidden, broadcast to batch

    ref_lp, ref_h = rnn_reference(xs, h0, raw_params)

    # --- f32 MXU-operand path (exact correctness check) ---
    params_f32 = prepare_params(raw_params, input_size, jnp.float32)
    lp, hf = rnn_forward_sequence(xs, h0, params_f32)
    jax.block_until_ready((lp, hf))
    assert lp.shape == (seq_len, batch, output_size)
    assert hf.shape == (batch, hidden_size)
    assert np.allclose(np.asarray(lp), ref_lp, rtol=1e-2, atol=1e-2)
    assert np.allclose(np.asarray(hf), ref_h, rtol=1e-2, atol=1e-2)
    assert np.allclose(np.exp(np.asarray(lp)).sum(axis=-1), 1.0, atol=1e-5)

    # --- bf16 MXU-operand path (native MXU rate on v6e/v7x; f32 accum/elementwise) ---
    params_bf16 = prepare_params(raw_params, input_size, jnp.bfloat16)
    lp16, hf16 = rnn_forward_sequence(xs, h0, params_bf16)
    jax.block_until_ready((lp16, hf16))
    assert np.allclose(np.asarray(lp16), ref_lp, rtol=5e-2, atol=5e-2)
    assert np.allclose(np.asarray(hf16), ref_h, rtol=5e-2, atol=5e-2)
    assert np.allclose(np.exp(np.asarray(lp16)).sum(axis=-1), 1.0, atol=1e-5)

    # --- single-step call matching RNN.forward(input, hidden) exactly ---
    step_lp, step_h = rnn_forward(xs[0], h0, params_f32)
    jax.block_until_ready((step_lp, step_h))
    assert step_lp.shape == (batch, output_size)
    assert step_h.shape == (batch, hidden_size)
    assert np.allclose(np.asarray(step_lp), ref_lp[0], rtol=1e-2, atol=1e-2)

    print("KERNEL_OK")
</pallas_src>

<mosaic_0001>
module attributes {stable_mosaic.version = 11 : i64} {
  func.func @rnn_seq_kernel(%arg0: memref<16x16xf32, #tpu.memory_space<vmem>>, %arg1: memref<2x32xf32, #tpu.memory_space<vmem>>, %arg2: memref<16x32xf32, #tpu.memory_space<vmem>>, %arg3: memref<32x32xf32, #tpu.memory_space<vmem>>, %arg4: memref<16x8xf32, #tpu.memory_space<vmem>>, %arg5: memref<32x8xf32, #tpu.memory_space<vmem>>, %arg6: memref<1x32xf32, #tpu.memory_space<vmem>>, %arg7: memref<1x8xf32, #tpu.memory_space<vmem>>, %arg8: memref<16x8xf32, #tpu.memory_space<vmem>>, %arg9: memref<2x32xf32, #tpu.memory_space<vmem>>, %arg10: memref<16x32xf32, #tpu.memory_space<vmem>>) attributes {dimension_semantics = [], scalar_prefetch = 0 : i64, scratch_operands = 1 : i64, tpu.core_type = #tpu.core_type<tc>} {
    %c0 = arith.constant 0 : index
    %c0_0 = arith.constant 0 : index
    %0 = vector.load %arg0[%c0, %c0_0] : memref<16x16xf32, #tpu.memory_space<vmem>>, vector<16x16xf32>
    %c0_1 = arith.constant 0 : index
    %c0_2 = arith.constant 0 : index
    %1 = vector.load %arg2[%c0_1, %c0_2] : memref<16x32xf32, #tpu.memory_space<vmem>>, vector<16x32xf32>
    %cst = arith.constant dense<0.000000e+00> : vector<16x32xf32>
    %2 = tpu.matmul %0, %1, %cst {dimension_numbers = #tpu.dot_dimension_numbers<[1], [0], [0], [1], [0, 0, 1, 1], [], []>} : vector<16x16xf32>, vector<16x32xf32>, vector<16x32xf32> -> vector<16x32xf32>
    %c0_3 = arith.constant 0 : index
    %c0_4 = arith.constant 0 : index
    %3 = vector.load %arg6[%c0_3, %c0_4] : memref<1x32xf32, #tpu.memory_space<vmem>>, vector<1x32xf32>
    %4 = vector.broadcast %3 : vector<1x32xf32> to vector<16x32xf32>
    %5 = arith.addf %2, %4 : vector<16x32xf32>
    %c0_5 = arith.constant 0 : index
    %c0_6 = arith.constant 0 : index
    %6 = vector.load %arg3[%c0_5, %c0_6] : memref<32x32xf32, #tpu.memory_space<vmem>>, vector<32x32xf32>
    %c0_7 = arith.constant 0 : index
    %c0_8 = arith.constant 0 : index
    %7 = vector.load %arg1[%c0_7, %c0_8] : memref<2x32xf32, #tpu.memory_space<vmem>>, vector<2x32xf32>
    %c0_9 = arith.constant 0 : index
    %c0_10 = arith.constant 0 : index
    %8 = vector.load %arg10[%c0_9, %c0_10] : memref<16x32xf32, #tpu.memory_space<vmem>>, vector<2x32xf32>
    tpu.vector_store %arg10[%c0_9, %c0_10], %7 {strides = array<i32>} : memref<16x32xf32, #tpu.memory_space<vmem>>, vector<2x32xf32>,
    %9 = vector.extract_strided_slice %5 {offsets = [0, 0], sizes = [2, 32], strides = [1, 1]} : vector<16x32xf32> to vector<2x32xf32>
    %cst_11 = arith.constant dense<0.000000e+00> : vector<2x32xf32>
    %10 = tpu.matmul %7, %6, %cst_11 {dimension_numbers = #tpu.dot_dimension_numbers<[1], [0], [0], [1], [0, 0, 1, 1], [], []>} : vector<2x32xf32>, vector<32x32xf32>, vector<2x32xf32> -> vector<2x32xf32>
    %11 = arith.addf %9, %10 : vector<2x32xf32>
    %c2 = arith.constant 2 : index
    %c0_12 = arith.constant 0 : index
    %12 = vector.load %arg10[%c2, %c0_12] : memref<16x32xf32, #tpu.memory_space<vmem>>, vector<2x32xf32>
    tpu.vector_store %arg10[%c2, %c0_12], %11 {strides = array<i32>} : memref<16x32xf32, #tpu.memory_space<vmem>>, vector<2x32xf32>,
    %13 = vector.extract_strided_slice %5 {offsets = [2, 0], sizes = [2, 32], strides = [1, 1]} : vector<16x32xf32> to vector<2x32xf32>
    %cst_13 = arith.constant dense<0.000000e+00> : vector<2x32xf32>
    %14 = tpu.matmul %11, %6, %cst_13 {dimension_numbers = #tpu.dot_dimension_numbers<[1], [0], [0], [1], [0, 0, 1, 1], [], []>} : vector<2x32xf32>, vector<32x32xf32>, vector<2x32xf32> -> vector<2x32xf32>
    %15 = arith.addf %13, %14 : vector<2x32xf32>
    %c4 = arith.constant 4 : index
    %c0_14 = arith.constant 0 : index
    %16 = vector.load %arg10[%c4, %c0_14] : memref<16x32xf32, #tpu.memory_space<vmem>>, vector<2x32xf32>
    tpu.vector_store %arg10[%c4, %c0_14], %15 {strides = array<i32>} : memref<16x32xf32, #tpu.memory_space<vmem>>, vector<2x32xf32>,
    %17 = vector.extract_strided_slice %5 {offsets = [4, 0], sizes = [2, 32], strides = [1, 1]} : vector<16x32xf32> to vector<2x32xf32>
    %cst_15 = arith.constant dense<0.000000e+00> : vector<2x32xf32>
    %18 = tpu.matmul %15, %6, %cst_15 {dimension_numbers = #tpu.dot_dimension_numbers<[1], [0], [0], [1], [0, 0, 1, 1], [], []>} : vector<2x32xf32>, vector<32x32xf32>, vector<2x32xf32> -> vector<2x32xf32>
    %19 = arith.addf %17, %18 : vector<2x32xf32>
    %c6 = arith.constant 6 : index
    %c0_16 = arith.constant 0 : index
    %20 = vector.load %arg10[%c6, %c0_16] : memref<16x32xf32, #tpu.memory_space<vmem>>, vector<2x32xf32>
    tpu.vector_store %arg10[%c6, %c0_16], %19 {strides = array<i32>} : memref<16x32xf32, #tpu.memory_space<vmem>>, vector<2x32xf32>,
    %21 = vector.extract_strided_slice %5 {offsets = [6, 0], sizes = [2, 32], strides = [1, 1]} : vector<16x32xf32> to vector<2x32xf32>
    %cst_17 = arith.constant dense<0.000000e+00> : vector<2x32xf32>
    %22 = tpu.matmul %19, %6, %cst_17 {dimension_numbers = #tpu.dot_dimension_numbers<[1], [0], [0], [1], [0, 0, 1, 1], [], []>} : vector<2x32xf32>, vector<32x32xf32>, vector<2x32xf32> -> vector<2x32xf32>
    %23 = arith.addf %21, %22 : vector<2x32xf32>
    %c8 = arith.constant 8 : index
    %c0_18 = arith.constant 0 : index
    %24 = vector.load %arg10[%c8, %c0_18] : memref<16x32xf32, #tpu.memory_space<vmem>>, vector<2x32xf32>
    tpu.vector_store %arg10[%c8, %c0_18], %23 {strides = array<i32>} : memref<16x32xf32, #tpu.memory_space<vmem>>, vector<2x32xf32>,
    %25 = vector.extract_strided_slice %5 {offsets = [8, 0], sizes = [2, 32], strides = [1, 1]} : vector<16x32xf32> to vector<2x32xf32>
    %cst_19 = arith.constant dense<0.000000e+00> : vector<2x32xf32>
    %26 = tpu.matmul %23, %6, %cst_19 {dimension_numbers = #tpu.dot_dimension_numbers<[1], [0], [0], [1], [0, 0, 1, 1], [], []>} : vector<2x32xf32>, vector<32x32xf32>, vector<2x32xf32> -> vector<2x32xf32>
    %27 = arith.addf %25, %26 : vector<2x32xf32>
    %c10 = arith.constant 10 : index
    %c0_20 = arith.constant 0 : index
    %28 = vector.load %arg10[%c10, %c0_20] : memref<16x32xf32, #tpu.memory_space<vmem>>, vector<2x32xf32>
    tpu.vector_store %arg10[%c10, %c0_20], %27 {strides = array<i32>} : memref<16x32xf32, #tpu.memory_space<vmem>>, vector<2x32xf32>,
    %29 = vector.extract_strided_slice %5 {offsets = [10, 0], sizes = [2, 32], strides = [1, 1]} : vector<16x32xf32> to vector<2x32xf32>
    %cst_21 = arith.constant dense<0.000000e+00> : vector<2x32xf32>
    %30 = tpu.matmul %27, %6, %cst_21 {dimension_numbers = #tpu.dot_dimension_numbers<[1], [0], [0], [1], [0, 0, 1, 1], [], []>} : vector<2x32xf32>, vector<32x32xf32>, vector<2x32xf32> -> vector<2x32xf32>
    %31 = arith.addf %29, %30 : vector<2x32xf32>
    %c12 = arith.constant 12 : index
    %c0_22 = arith.constant 0 : index
    %32 = vector.load %arg10[%c12, %c0_22] : memref<16x32xf32, #tpu.memory_space<vmem>>, vector<2x32xf32>
    tpu.vector_store %arg10[%c12, %c0_22], %31 {strides = array<i32>} : memref<16x32xf32, #tpu.memory_space<vmem>>, vector<2x32xf32>,
    %33 = vector.extract_strided_slice %5 {offsets = [12, 0], sizes = [2, 32], strides = [1, 1]} : vector<16x32xf32> to vector<2x32xf32>
    %cst_23 = arith.constant dense<0.000000e+00> : vector<2x32xf32>
    %34 = tpu.matmul %31, %6, %cst_23 {dimension_numbers = #tpu.dot_dimension_numbers<[1], [0], [0], [1], [0, 0, 1, 1], [], []>} : vector<2x32xf32>, vector<32x32xf32>, vector<2x32xf32> -> vector<2x32xf32>
    %35 = arith.addf %33, %34 : vector<2x32xf32>
    %c14 = arith.constant 14 : index
    %c0_24 = arith.constant 0 : index
    %36 = vector.load %arg10[%c14, %c0_24] : memref<16x32xf32, #tpu.memory_space<vmem>>, vector<2x32xf32>
    tpu.vector_store %arg10[%c14, %c0_24], %35 {strides = array<i32>} : memref<16x32xf32, #tpu.memory_space<vmem>>, vector<2x32xf32>,
    %37 = vector.extract_strided_slice %5 {offsets = [14, 0], sizes = [2, 32], strides = [1, 1]} : vector<16x32xf32> to vector<2x32xf32>
    %cst_25 = arith.constant dense<0.000000e+00> : vector<2x32xf32>
    %38 = tpu.matmul %35, %6, %cst_25 {dimension_numbers = #tpu.dot_dimension_numbers<[1], [0], [0], [1], [0, 0, 1, 1], [], []>} : vector<2x32xf32>, vector<32x32xf32>, vector<2x32xf32> -> vector<2x32xf32>
    %39 = arith.addf %37, %38 : vector<2x32xf32>
    %c0_26 = arith.constant 0 : index
    %c0_27 = arith.constant 0 : index
    %40 = vector.load %arg9[%c0_26, %c0_27] : memref<2x32xf32, #tpu.memory_space<vmem>>, vector<2x32xf32>
    tpu.vector_store %arg9[%c0_26, %c0_27], %39 {strides = array<i32>} : memref<2x32xf32, #tpu.memory_space<vmem>>, vector<2x32xf32>,
    %c0_28 = arith.constant 0 : index
    %c0_29 = arith.constant 0 : index
    %41 = vector.load %arg4[%c0_28, %c0_29] : memref<16x8xf32, #tpu.memory_space<vmem>>, vector<16x8xf32>
    %cst_30 = arith.constant dense<0.000000e+00> : vector<16x8xf32>
    %42 = tpu.matmul %0, %41, %cst_30 {dimension_numbers = #tpu.dot_dimension_numbers<[1], [0], [0], [1], [0, 0, 1, 1], [], []>} : vector<16x16xf32>, vector<16x8xf32>, vector<16x8xf32> -> vector<16x8xf32>
    %c0_31 = arith.constant 0 : index
    %c0_32 = arith.constant 0 : index
    %43 = vector.load %arg10[%c0_31, %c0_32] : memref<16x32xf32, #tpu.memory_space<vmem>>, vector<16x32xf32>
    %c0_33 = arith.constant 0 : index
    %c0_34 = arith.constant 0 : index
    %44 = vector.load %arg5[%c0_33, %c0_34] : memref<32x8xf32, #tpu.memory_space<vmem>>, vector<32x8xf32>
    %cst_35 = arith.constant dense<0.000000e+00> : vector<16x8xf32>
    %45 = tpu.matmul %43, %44, %cst_35 {dimension_numbers = #tpu.dot_dimension_numbers<[1], [0], [0], [1], [0, 0, 1, 1], [], []>} : vector<16x32xf32>, vector<32x8xf32>, vector<16x8xf32> -> vector<16x8xf32>
    %46 = arith.addf %42, %45 : vector<16x8xf32>
    %c0_36 = arith.constant 0 : index
    %c0_37 = arith.constant 0 : index
    %47 = vector.load %arg7[%c0_36, %c0_37] : memref<1x8xf32, #tpu.memory_space<vmem>>, vector<1x8xf32>
    %48 = vector.broadcast %47 : vector<1x8xf32> to vector<16x8xf32>
    %49 = arith.addf %46, %48 : vector<16x8xf32>
    %cst_38 = arith.constant dense<0xFF800000> : vector<16xf32>
    %50 = vector.multi_reduction <maximumf>, %49, %cst_38 [1] : vector<16x8xf32> to vector<16xf32>
    %51 = vector.shape_cast %50 : vector<16xf32> to vector<16x1xf32>
    %52 = vector.broadcast %51 : vector<16x1xf32> to vector<16x8xf32>
    %53 = arith.subf %49, %52 : vector<16x8xf32>
    %54 = math.exp %53 : vector<16x8xf32>
    %cst_39 = arith.constant dense<0.000000e+00> : vector<16xf32>
    %55 = vector.multi_reduction <add>, %54, %cst_39 [1] : vector<16x8xf32> to vector<16xf32>
    %56 = vector.shape_cast %55 : vector<16xf32> to vector<16x1xf32>
    %57 = math.log %56 : vector<16x1xf32>
    %58 = arith.addf %51, %57 : vector<16x1xf32>
    %59 = vector.broadcast %58 : vector<16x1xf32> to vector<16x8xf32>
    %60 = arith.subf %49, %59 : vector<16x8xf32>
    %c0_40 = arith.constant 0 : index
    %c0_41 = arith.constant 0 : index
    %61 = vector.load %arg8[%c0_40, %c0_41] : memref<16x8xf32, #tpu.memory_space<vmem>>, vector<16x8xf32>
    tpu.vector_store %arg8[%c0_40, %c0_41], %60 {strides = array<i32>} : memref<16x8xf32, #tpu.memory_space<vmem>>, vector<16x8xf32>,
    return
  }
}

</mosaic_0001>

<llo_original>
// kernel: rnn_forward_sequence.1
$region0: #{rnn_forward_sequence.1}
  #allocation0 [shape = 'u32[]', space=smem, size = 0x4, offset = 0x4, fixed_abs, tag = 'smem constant byte address 0x4 - core index']
  #allocation1 [shape = 'u32[144,128]{1,0:T(1,128)}', space=vmem, size = 0x12000, scoped, tag = 'internal scratch']
  #allocation2 [shape = 'f32[16,32]{1,0:T(8,128)}', space=vmem, size = 0x2000, scoped, tag = 'scratch operand']
  %s0 = inlined_call_operand.vmem [shape: f32[16,16], index: 0, kind: input, shape index: {}]
  %s1 = inlined_call_operand.vmem [shape: f32[2,32], index: 1, kind: input, shape index: {}]
  %s2 = inlined_call_operand.vmem [shape: f32[16,32], index: 2, kind: input, shape index: {}]
  %s3 = inlined_call_operand.vmem [shape: f32[32,32], index: 3, kind: input, shape index: {}]
  %s4 = inlined_call_operand.vmem [shape: f32[16,8], index: 4, kind: input, shape index: {}]
  %s5 = inlined_call_operand.vmem [shape: f32[32,8], index: 5, kind: input, shape index: {}]
  %s6 = inlined_call_operand.vmem [shape: f32[1,32], index: 6, kind: input, shape index: {}]
  %s7 = inlined_call_operand.vmem [shape: f32[1,8], index: 7, kind: input, shape index: {}]
  %s8 = inlined_call_operand.hbm [shape: f32[16,8], index: 8, kind: output, shape index: {0}]
  %s9 = inlined_call_operand.hbm [shape: f32[2,32], index: 9, kind: output, shape index: {1}]
  %10 = xla_tuple %s8, %s9
  %s11 = sld [smem:[#allocation0]]
  $region50: #{rnn_forward_sequence.1} parent=0
    _
  %s13 = ssub.s32 1, %s11
  %s14 = scalar_select 0, %s13, %s11
  $region1: #{rnn_forward_sequence.1} parent=0
    #allocation3 [shape = 'u8[8192]{0}', space=vmem, size = 0x2000, scoped, tag = 'output window, operand 0, single buffered']
    #allocation4 [shape = 's32[1]{0}', space=sflag, size = 0x4, scoped, tag = 'scoped memory for rnn_forward_sequence.1']
    #allocation5 [shape = 'u8[1024]{0}', space=vmem, size = 0x400, scoped, tag = 'output window, operand 1, single buffered']
    #allocation6 [shape = 's32[1]{0}', space=sflag, size = 0x4, scoped, tag = 'scoped memory for rnn_forward_sequence.1']
    %15 = vsyncpa [#allocation4], 0
    %16 = vsyncpa [#allocation6], 0
    // Predicated region
    $region2: #{rnn_forward_sequence.1} parent=1 // pred_check
      _
    $region3: #{rnn_forward_sequence.1} parent=1 // pred_check_branch
      %18 = sbr.rel (0) target = $region5
    $region4: #{rnn_forward_sequence.1} parent=1 // pred_region
      _
    $region5: #{rnn_forward_sequence.1} parent=1 // pred_fallthru
      _
    // Predicated region
    $region6: #{rnn_forward_sequence.1} parent=1 // pred_check
      _
    $region7: #{rnn_forward_sequence.1} parent=1 // pred_check_branch
      %20 = sbr.rel (0) target = $region9
    $region8: #{rnn_forward_sequence.1} parent=1 // pred_region
      _
    $region9: #{rnn_forward_sequence.1} parent=1 // pred_fallthru
      _
    // Predicated region
    $region10: #{rnn_forward_sequence.1} parent=1 // pred_check
      _
    $region11: #{rnn_forward_sequence.1} parent=1 // pred_check_branch
      %22 = sbr.rel (0) target = $region13
    $region12: #{rnn_forward_sequence.1} parent=1 // pred_region
      _
    $region13: #{rnn_forward_sequence.1} parent=1 // pred_fallthru
      _
    // Predicated region
    $region14: #{rnn_forward_sequence.1} parent=1 // pred_check
      _
    $region15: #{rnn_forward_sequence.1} parent=1 // pred_check_branch
      %24 = sbr.rel (0) target = $region17
    $region16: #{rnn_forward_sequence.1} parent=1 // pred_region
      _
    $region17: #{rnn_forward_sequence.1} parent=1 // pred_fallthru
      _
    // Predicated region
    $region18: #{rnn_forward_sequence.1} parent=1 // pred_check
      _
    $region19: #{rnn_forward_sequence.1} parent=1 // pred_check_branch
      %26 = sbr.rel (0) target = $region21
    $region20: #{rnn_forward_sequence.1} parent=1 // pred_region
      _
    $region21: #{rnn_forward_sequence.1} parent=1 // pred_fallthru
      _
    // Predicated region
    $region22: #{rnn_forward_sequence.1} parent=1 // pred_check
      _
    $region23: #{rnn_forward_sequence.1} parent=1 // pred_check_branch
      %28 = sbr.rel (0) target = $region25
    $region24: #{rnn_forward_sequence.1} parent=1 // pred_region
      _
    $region25: #{rnn_forward_sequence.1} parent=1 // pred_fallthru
      _
    // Predicated region
    $region26: #{rnn_forward_sequence.1} parent=1 // pred_check
      _
    $region27: #{rnn_forward_sequence.1} parent=1 // pred_check_branch
      %30 = sbr.rel (0) target = $region29
    $region28: #{rnn_forward_sequence.1} parent=1 // pred_region
      _
    $region29: #{rnn_forward_sequence.1} parent=1 // pred_fallthru
      _
    // Predicated region
    $region30: #{rnn_forward_sequence.1} parent=1 // pred_check
      _
    $region31: #{rnn_forward_sequence.1} parent=1 // pred_check_branch
      %32 = sbr.rel (0) target = $region33
    $region32: #{rnn_forward_sequence.1} parent=1 // pred_region
      _
    $region33: #{rnn_forward_sequence.1} parent=1 // pred_fallthru
      _
    %v33 = vld [vmem:[%s0] sm:$0xff]
    %v34 = vld [vmem:[%s0 + $0x8] sm:$0xff]
    %v35 = vld [vmem:[%s2] sm:$0xff]
    %v36 = vld [vmem:[%s2 + $0x8] sm:$0xff]
    %v37 = vld [vmem:[%s6] sm:$0x1]
    %v39 = vlaneseq
    %v40 = vshrl.u32 %v39, 7
    %v41 = vsub.s32 0, %v40
    %v42 = vrot.slane %v37, %v41
    %vm44 = vcmask 130048
    %v46 = vsel %vm44, %v33, 0
    %v49 = vsel %vm44, %v34, 0
    %51 = vmatprep.subr.mxu0 0.0
    %52 = vmatpush1.msra.mxu0 %v35
    %53 = vmatprep.subr.mxu0 0.0
    %54 = vmatpush1.msra.mxu0 %v36
    %55 = vmatprep.subr.mxu0 0.0
    %56 = vmatpush1.msra.mxu0 0.0
    %57 = vmatprep.subr.mxu0 0.0
    %58 = vmatpush1.msra.mxu0 0.0
    %59 = vmatprep.subr.mxu0 0.0
    %60 = vmatpush1.msra.mxu0 0.0
    %61 = vmatprep.subr.mxu0 0.0
    %62 = vmatpush1.msra.mxu0 0.0
    %63 = vmatprep.subr.mxu0 0.0
    %64 = vmatpush1.msra.mxu0 0.0
    %65 = vmatprep.subr.mxu0 0.0
    %66 = vmatpush1.msra.mxu0 0.0
    %67 = vmatprep.subr.mxu0 0.0
    %68 = vmatpush1.msra.mxu0 0.0
    %69 = vmatprep.subr.mxu0 0.0
    %70 = vmatpush1.msra.mxu0 0.0
    %71 = vmatprep.subr.mxu0 0.0
    %72 = vmatpush1.msra.mxu0 0.0
    %73 = vmatprep.subr.mxu0 0.0
    %74 = vmatpush1.msra.mxu0 0.0
    %75 = vmatprep.subr.mxu0 0.0
    %76 = vmatpush1.msra.mxu0 0.0
    %77 = vmatprep.subr.mxu0 0.0
    %78 = vmatpush1.msra.mxu0 0.0
    %79 = vmatprep.subr.mxu0 0.0
    %80 = vmatpush1.msra.mxu0 0.0
    %81 = vmatprep.subr.mxu0 0.0
    %82 = vmatpush1.msra.mxu0 0.0
    %83 = vmatprep.subr.mxu0 0.0
    %84 = vmatpush1.msra.mxu0 0.0
    %85 = vmatprep.subr.mxu0 0.0
    %86 = vmatpush1.msra.mxu0 0.0
    %87 = vmatprep.subr.mxu0 0.0
    %88 = vmatpush1.msra.mxu0 0.0
    %89 = vmatprep.subr.mxu0 0.0
    %90 = vmatpush1.msra.mxu0 0.0
    %91 = vmatprep.subr.mxu0 0.0
    %92 = vmatpush1.msra.mxu0 0.0
    %93 = vmatprep.subr.mxu0 0.0
    %94 = vmatpush1.msra.mxu0 0.0
    %95 = vmatprep.subr.mxu0 0.0
    %96 = vmatpush1.msra.mxu0 0.0
    %97 = vmatprep.subr.mxu0 0.0
    %98 = vmatpush1.msra.mxu0 0.0
    %99 = vmatprep.subr.mxu0 0.0
    %100 = vmatpush1.msra.mxu0 0.0
    %101 = vmatprep.subr.mxu0 0.0
    %102 = vmatpush1.msra.mxu0 0.0
    %103 = vmatprep.subr.mxu0 0.0
    %104 = vmatpush1.msra.mxu0 0.0
    %105 = vmatprep.subr.mxu0 0.0
    %106 = vmatpush1.msra.mxu0 0.0
    %107 = vmatprep.subr.mxu0 0.0
    %108 = vmatpush1.msra.mxu0 0.0
    %109 = vmatprep.subr.mxu0 0.0
    %110 = vmatpush1.msra.mxu0 0.0
    %111 = vmatprep.subr.mxu0 0.0
    %112 = vmatpush1.msra.mxu0 0.0
    %113 = vmatprep.subr.mxu0 0.0
    %114 = vmatpush1.msra.mxu0 0.0
    %115 = vmatprep.mubr.f32.mxu0 0.0
    %116 = vmatmul.mubr.f32.gmra.mrb[0].mxu0 %v46
    %v117 = vpop.f32.mrb[0].mxu0
    %v118 = vadd.f32 %v42, %v117
    %v119 = vpop.f32.mrb[0].mxu0
    %120 = vmatprep.mubr.f32.mxu0 0.0
    %121 = vmatmul.mubr.f32.gmra.mrb[0].mxu0 %v49
    %v122 = vpop.f32.mrb[0].mxu0
    %v123 = vadd.f32 %v42, %v122
    %v124 = vpop.f32.mrb[0].mxu0
    %125 = vdwg.mxu0
    %v126 = vld [vmem:[%s3] sm:$0xff]
    %v127 = vld [vmem:[%s3 + $0x8] sm:$0xff]
    %v128 = vld [vmem:[%s3 + $0x10] sm:$0xff]
    %v129 = vld [vmem:[%s3 + $0x18] sm:$0xff]
    %v130 = vld [vmem:[%s1] sm:$0x3]
    %vm131 = vcmask 254976
    %132 = vst.msk [vmem:[#allocation2] sm:$0x3] %vm131, %v130
    %vm133 = vcmask 261120
    %v135 = vsel %vm133, %v130, 0
    %137 = vmatprep.subr.mxu0 0.0
    %138 = vmatpush1.msra.mxu0 %v126
    %139 = vmatprep.subr.mxu0 0.0
    %140 = vmatpush1.msra.mxu0 %v127
    %141 = vmatprep.subr.mxu0 0.0
    %142 = vmatpush1.msra.mxu0 %v128
    %143 = vmatprep.subr.mxu0 0.0
    %144 = vmatpush1.msra.mxu0 %v129
    %145 = vmatprep.subr.mxu0 0.0
    %146 = vmatpush1.msra.mxu0 0.0
    %147 = vmatprep.subr.mxu0 0.0
    %148 = vmatpush1.msra.mxu0 0.0
    %149 = vmatprep.subr.mxu0 0.0
    %150 = vmatpush1.msra.mxu0 0.0
    %151 = vmatprep.subr.mxu0 0.0
    %152 = vmatpush1.msra.mxu0 0.0
    %153 = vmatprep.subr.mxu0 0.0
    %154 = vmatpush1.msra.mxu0 0.0
    %155 = vmatprep.subr.mxu0 0.0
    %156 = vmatpush1.msra.mxu0 0.0
    %157 = vmatprep.subr.mxu0 0.0
    %158 = vmatpush1.msra.mxu0 0.0
    %159 = vmatprep.subr.mxu0 0.0
    %160 = vmatpush1.msra.mxu0 0.0
    %161 = vmatprep.subr.mxu0 0.0
    %162 = vmatpush1.msra.mxu0 0.0
    %163 = vmatprep.subr.mxu0 0.0
    %164 = vmatpush1.msra.mxu0 0.0
    %165 = vmatprep.subr.mxu0 0.0
    %166 = vmatpush1.msra.mxu0 0.0
    %167 = vmatprep.subr.mxu0 0.0
    %168 = vmatpush1.msra.mxu0 0.0
    %169 = vmatprep.subr.mxu0 0.0
    %170 = vmatpush1.msra.mxu0 0.0
    %171 = vmatprep.subr.mxu0 0.0
    %172 = vmatpush1.msra.mxu0 0.0
    %173 = vmatprep.subr.mxu0 0.0
    %174 = vmatpush1.msra.mxu0 0.0
    %175 = vmatprep.subr.mxu0 0.0
    %176 = vmatpush1.msra.mxu0 0.0
    %177 = vmatprep.subr.mxu0 0.0
    %178 = vmatpush1.msra.mxu0 0.0
    %179 = vmatprep.subr.mxu0 0.0
    %180 = vmatpush1.msra.mxu0 0.0
    %181 = vmatprep.subr.mxu0 0.0
    %182 = vmatpush1.msra.mxu0 0.0
    %183 = vmatprep.subr.mxu0 0.0
    %184 = vmatpush1.msra.mxu0 0.0
    %185 = vmatprep.subr.mxu0 0.0
    %186 = vmatpush1.msra.mxu0 0.0
    %187 = vmatprep.subr.mxu0 0.0
    %188 = vmatpush1.msra.mxu0 0.0
    %189 = vmatprep.subr.mxu0 0.0
    %190 = vmatpush1.msra.mxu0 0.0
    %191 = vmatprep.subr.mxu0 0.0
    %192 = vmatpush1.msra.mxu0 0.0
    %193 = vmatprep.subr.mxu0 0.0
    %194 = vmatpush1.msra.mxu0 0.0
    %195 = vmatprep.subr.mxu0 0.0
    %196 = vmatpush1.msra.mxu0 0.0
    %197 = vmatprep.subr.mxu0 0.0
    %198 = vmatpush1.msra.mxu0 0.0
    %199 = vmatprep.subr.mxu0 0.0
    %200 = vmatpush1.msra.mxu0 0.0
    %201 = vmatprep.mubr.f32.mxu0 0.0
    %202 = vmatmul.mubr.f32.gmra.mrb[0].mxu0 %v135
    %v203 = vpop.f32.mrb[0].mxu0
    %v204 = vadd.f32 0.0, %v203
    %v205 = vpop.f32.mrb[0].mxu0
    %206 = vdwg.mxu0
    %v207 = vadd.f32 %v118, %v204
    %208 = vst.msk [vmem:[#allocation2 + $0x2] sm:$0x3] %vm131, %v207
    %v210 = vsel %vm133, %v207, 0
    %212 = vmatprep.subr.mxu0 0.0
    %213 = vmatpush1.msra.mxu0 %v126
    %214 = vmatprep.subr.mxu0 0.0
    %215 = vmatpush1.msra.mxu0 %v127
    %216 = vmatprep.subr.mxu0 0.0
    %217 = vmatpush1.msra.mxu0 %v128
    %218 = vmatprep.subr.mxu0 0.0
    %219 = vmatpush1.msra.mxu0 %v129
    %220 = vmatprep.subr.mxu0 0.0
    %221 = vmatpush1.msra.mxu0 0.0
    %222 = vmatprep.subr.mxu0 0.0
    %223 = vmatpush1.msra.mxu0 0.0
    %224 = vmatprep.subr.mxu0 0.0
    %225 = vmatpush1.msra.mxu0 0.0
    %226 = vmatprep.subr.mxu0 0.0
    %227 = vmatpush1.msra.mxu0 0.0
    %228 = vmatprep.subr.mxu0 0.0
    %229 = vmatpush1.msra.mxu0 0.0
    %230 = vmatprep.subr.mxu0 0.0
    %231 = vmatpush1.msra.mxu0 0.0
    %232 = vmatprep.subr.mxu0 0.0
    %233 = vmatpush1.msra.mxu0 0.0
    %234 = vmatprep.subr.mxu0 0.0
    %235 = vmatpush1.msra.mxu0 0.0
    %236 = vmatprep.subr.mxu0 0.0
    %237 = vmatpush1.msra.mxu0 0.0
    %238 = vmatprep.subr.mxu0 0.0
    %239 = vmatpush1.msra.mxu0 0.0
    %240 = vmatprep.subr.mxu0 0.0
    %241 = vmatpush1.msra.mxu0 0.0
    %242 = vmatprep.subr.mxu0 0.0
    %243 = vmatpush1.msra.mxu0 0.0
    %244 = vmatprep.subr.mxu0 0.0
    %245 = vmatpush1.msra.mxu0 0.0
    %246 = vmatprep.subr.mxu0 0.0
    %247 = vmatpush1.msra.mxu0 0.0
    %248 = vmatprep.subr.mxu0 0.0
    %249 = vmatpush1.msra.mxu0 0.0
    %250 = vmatprep.subr.mxu0 0.0
    %251 = vmatpush1.msra.mxu0 0.0
    %252 = vmatprep.subr.mxu0 0.0
    %253 = vmatpush1.msra.mxu0 0.0
    %254 = vmatprep.subr.mxu0 0.0
    %255 = vmatpush1.msra.mxu0 0.0
    %256 = vmatprep.subr.mxu0 0.0
    %257 = vmatpush1.msra.mxu0 0.0
    %258 = vmatprep.subr.mxu0 0.0
    %259 = vmatpush1.msra.mxu0 0.0
    %260 = vmatprep.subr.mxu0 0.0
    %261 = vmatpush1.msra.mxu0 0.0
    %262 = vmatprep.subr.mxu0 0.0
    %263 = vmatpush1.msra.mxu0 0.0
    %264 = vmatprep.subr.mxu0 0.0
    %265 = vmatpush1.msra.mxu0 0.0
    %266 = vmatprep.subr.mxu0 0.0
    %267 = vmatpush1.msra.mxu0 0.0
    %268 = vmatprep.subr.mxu0 0.0
    %269 = vmatpush1.msra.mxu0 0.0
    %270 = vmatprep.subr.mxu0 0.0
    %271 = vmatpush1.msra.mxu0 0.0
    %272 = vmatprep.subr.mxu0 0.0
    %273 = vmatpush1.msra.mxu0 0.0
    %274 = vmatprep.subr.mxu0 0.0
    %275 = vmatpush1.msra.mxu0 0.0
    %276 = vmatprep.mubr.f32.mxu0 0.0
    %277 = vmatmul.mubr.f32.gmra.mrb[0].mxu0 %v210
    %v278 = vpop.f32.mrb[0].mxu0
    %v279 = vadd.f32 0.0, %v278
    %v280 = vpop.f32.mrb[0].mxu0
    %281 = vdwg.mxu0
    %v283 = vrot.slane %v279, 6
    %v285 = vadd.f32 %v118, %v283
    %vm286 = vcmask 257026
    %287 = vst.msk [vmem:[#allocation2 + $0x2] sm:$0xc] %vm286, %v285
    %v289 = vrot.slane %v285, 2
    %v290 = vsel %vm133, %v289, 0
    %292 = vmatprep.subr.mxu0 0.0
    %293 = vmatpush1.msra.mxu0 %v126
    %294 = vmatprep.subr.mxu0 0.0
    %295 = vmatpush1.msra.mxu0 %v127
    %296 = vmatprep.subr.mxu0 0.0
    %297 = vmatpush1.msra.mxu0 %v128
    %298 = vmatprep.subr.mxu0 0.0
    %299 = vmatpush1.msra.mxu0 %v129
    %300 = vmatprep.subr.mxu0 0.0
    %301 = vmatpush1.msra.mxu0 0.0
    %302 = vmatprep.subr.mxu0 0.0
    %303 = vmatpush1.msra.mxu0 0.0
    %304 = vmatprep.subr.mxu0 0.0
    %305 = vmatpush1.msra.mxu0 0.0
    %306 = vmatprep.subr.mxu0 0.0
    %307 = vmatpush1.msra.mxu0 0.0
    %308 = vmatprep.subr.mxu0 0.0
    %309 = vmatpush1.msra.mxu0 0.0
    %310 = vmatprep.subr.mxu0 0.0
    %311 = vmatpush1.msra.mxu0 0.0
    %312 = vmatprep.subr.mxu0 0.0
    %313 = vmatpush1.msra.mxu0 0.0
    %314 = vmatprep.subr.mxu0 0.0
    %315 = vmatpush1.msra.mxu0 0.0
    %316 = vmatprep.subr.mxu0 0.0
    %317 = vmatpush1.msra.mxu0 0.0
    %318 = vmatprep.subr.mxu0 0.0
    %319 = vmatpush1.msra.mxu0 0.0
    %320 = vmatprep.subr.mxu0 0.0
    %321 = vmatpush1.msra.mxu0 0.0
    %322 = vmatprep.subr.mxu0 0.0
    %323 = vmatpush1.msra.mxu0 0.0
    %324 = vmatprep.subr.mxu0 0.0
    %325 = vmatpush1.msra.mxu0 0.0
    %326 = vmatprep.subr.mxu0 0.0
    %327 = vmatpush1.msra.mxu0 0.0
    %328 = vmatprep.subr.mxu0 0.0
    %329 = vmatpush1.msra.mxu0 0.0
    %330 = vmatprep.subr.mxu0 0.0
    %331 = vmatpush1.msra.mxu0 0.0
    %332 = vmatprep.subr.mxu0 0.0
    %333 = vmatpush1.msra.mxu0 0.0
    %334 = vmatprep.subr.mxu0 0.0
    %335 = vmatpush1.msra.mxu0 0.0
    %336 = vmatprep.subr.mxu0 0.0
    %337 = vmatpush1.msra.mxu0 0.0
    %338 = vmatprep.subr.mxu0 0.0
    %339 = vmatpush1.msra.mxu0 0.0
    %340 = vmatprep.subr.mxu0 0.0
    %341 = vmatpush1.msra.mxu0 0.0
    %342 = vmatprep.subr.mxu0 0.0
    %343 = vmatpush1.msra.mxu0 0.0
    %344 = vmatprep.subr.mxu0 0.0
    %345 = vmatpush1.msra.mxu0 0.0
    %346 = vmatprep.subr.mxu0 0.0
    %347 = vmatpush1.msra.mxu0 0.0
    %348 = vmatprep.subr.mxu0 0.0
    %349 = vmatpush1.msra.mxu0 0.0
    %350 = vmatprep.subr.mxu0 0.0
    %351 = vmatpush1.msra.mxu0 0.0
    %352 = vmatprep.subr.mxu0 0.0
    %353 = vmatpush1.msra.mxu0 0.0
    %354 = vmatprep.subr.mxu0 0.0
    %355 = vmatpush1.msra.mxu0 0.0
    %356 = vmatprep.mubr.f32.mxu0 0.0
    %357 = vmatmul.mubr.f32.gmra.mrb[0].mxu0 %v290
    %v358 = vpop.f32.mrb[0].mxu0
    %v359 = vadd.f32 0.0, %v358
    %v360 = vpop.f32.mrb[0].mxu0
    %361 = vdwg.mxu0
    %v363 = vrot.slane %v359, 4
    %v365 = vadd.f32 %v118, %v363
    %vm366 = vcmask 259076
    %367 = vst.msk [vmem:[#allocation2 + $0x2] sm:$0x30] %vm366, %v365
    %v369 = vrot.slane %v365, 4
    %v370 = vsel %vm133, %v369, 0
    %372 = vmatprep.subr.mxu0 0.0
    %373 = vmatpush1.msra.mxu0 %v126
    %374 = vmatprep.subr.mxu0 0.0
    %375 = vmatpush1.msra.mxu0 %v127
    %376 = vmatprep.subr.mxu0 0.0
    %377 = vmatpush1.msra.mxu0 %v128
    %378 = vmatprep.subr.mxu0 0.0
    %379 = vmatpush1.msra.mxu0 %v129
    %380 = vmatprep.subr.mxu0 0.0
    %381 = vmatpush1.msra.mxu0 0.0
    %382 = vmatprep.subr.mxu0 0.0
    %383 = vmatpush1.msra.mxu0 0.0
    %384 = vmatprep.subr.mxu0 0.0
    %385 = vmatpush1.msra.mxu0 0.0
    %386 = vmatprep.subr.mxu0 0.0
    %387 = vmatpush1.msra.mxu0 0.0
    %388 = vmatprep.subr.mxu0 0.0
    %389 = vmatpush1.msra.mxu0 0.0
    %390 = vmatprep.subr.mxu0 0.0
    %391 = vmatpush1.msra.mxu0 0.0
    %392 = vmatprep.subr.mxu0 0.0
    %393 = vmatpush1.msra.mxu0 0.0
    %394 = vmatprep.subr.mxu0 0.0
    %395 = vmatpush1.msra.mxu0 0.0
    %396 = vmatprep.subr.mxu0 0.0
    %397 = vmatpush1.msra.mxu0 0.0
    %398 = vmatprep.subr.mxu0 0.0
    %399 = vmatpush1.msra.mxu0 0.0
    %400 = vmatprep.subr.mxu0 0.0
    %401 = vmatpush1.msra.mxu0 0.0
    %402 = vmatprep.subr.mxu0 0.0
    %403 = vmatpush1.msra.mxu0 0.0
    %404 = vmatprep.subr.mxu0 0.0
    %405 = vmatpush1.msra.mxu0 0.0
    %406 = vmatprep.subr.mxu0 0.0
    %407 = vmatpush1.msra.mxu0 0.0
    %408 = vmatprep.subr.mxu0 0.0
    %409 = vmatpush1.msra.mxu0 0.0
    %410 = vmatprep.subr.mxu0 0.0
    %411 = vmatpush1.msra.mxu0 0.0
    %412 = vmatprep.subr.mxu0 0.0
    %413 = vmatpush1.msra.mxu0 0.0
    %414 = vmatprep.subr.mxu0 0.0
    %415 = vmatpush1.msra.mxu0 0.0
    %416 = vmatprep.subr.mxu0 0.0
    %417 = vmatpush1.msra.mxu0 0.0
    %418 = vmatprep.subr.mxu0 0.0
    %419 = vmatpush1.msra.mxu0 0.0
    %420 = vmatprep.subr.mxu0 0.0
    %421 = vmatpush1.msra.mxu0 0.0
    %422 = vmatprep.subr.mxu0 0.0
    %423 = vmatpush1.msra.mxu0 0.0
    %424 = vmatprep.subr.mxu0 0.0
    %425 = vmatpush1.msra.mxu0 0.0
    %426 = vmatprep.subr.mxu0 0.0
    %427 = vmatpush1.msra.mxu0 0.0
    %428 = vmatprep.subr.mxu0 0.0
    %429 = vmatpush1.msra.mxu0 0.0
    %430 = vmatprep.subr.mxu0 0.0
    %431 = vmatpush1.msra.mxu0 0.0
    %432 = vmatprep.subr.mxu0 0.0
    %433 = vmatpush1.msra.mxu0 0.0
    %434 = vmatprep.subr.mxu0 0.0
    %435 = vmatpush1.msra.mxu0 0.0
    %436 = vmatprep.mubr.f32.mxu0 0.0
    %437 = vmatmul.mubr.f32.gmra.mrb[0].mxu0 %v370
    %v438 = vpop.f32.mrb[0].mxu0
    %v439 = vadd.f32 0.0, %v438
    %v440 = vpop.f32.mrb[0].mxu0
    %441 = vdwg.mxu0
    %v443 = vrot.slane %v439, 2
    %v445 = vadd.f32 %v118, %v443
    %vm446 = vcmask 261126
    %447 = vst.msk [vmem:[#allocation2 + $0x2] sm:$0xc0] %vm446, %v445
    %v449 = vrot.slane %v445, 6
    %v450 = vsel %vm133, %v449, 0
    %452 = vmatprep.subr.mxu0 0.0
    %453 = vmatpush1.msra.mxu0 %v126
    %454 = vmatprep.subr.mxu0 0.0
    %455 = vmatpush1.msra.mxu0 %v127
    %456 = vmatprep.subr.mxu0 0.0
    %457 = vmatpush1.msra.mxu0 %v128
    %458 = vmatprep.subr.mxu0 0.0
    %459 = vmatpush1.msra.mxu0 %v129
    %460 = vmatprep.subr.mxu0 0.0
    %461 = vmatpush1.msra.mxu0 0.0
    %462 = vmatprep.subr.mxu0 0.0
    %463 = vmatpush1.msra.mxu0 0.0
    %464 = vmatprep.subr.mxu0 0.0
    %465 = vmatpush1.msra.mxu0 0.0
    %466 = vmatprep.subr.mxu0 0.0
    %467 = vmatpush1.msra.mxu0 0.0
    %468 = vmatprep.subr.mxu0 0.0
    %469 = vmatpush1.msra.mxu0 0.0
    %470 = vmatprep.subr.mxu0 0.0
    %471 = vmatpush1.msra.mxu0 0.0
    %472 = vmatprep.subr.mxu0 0.0
    %473 = vmatpush1.msra.mxu0 0.0
    %474 = vmatprep.subr.mxu0 0.0
    %475 = vmatpush1.msra.mxu0 0.0
    %476 = vmatprep.subr.mxu0 0.0
    %477 = vmatpush1.msra.mxu0 0.0
    %478 = vmatprep.subr.mxu0 0.0
    %479 = vmatpush1.msra.mxu0 0.0
    %480 = vmatprep.subr.mxu0 0.0
    %481 = vmatpush1.msra.mxu0 0.0
    %482 = vmatprep.subr.mxu0 0.0
    %483 = vmatpush1.msra.mxu0 0.0
    %484 = vmatprep.subr.mxu0 0.0
    %485 = vmatpush1.msra.mxu0 0.0
    %486 = vmatprep.subr.mxu0 0.0
    %487 = vmatpush1.msra.mxu0 0.0
    %488 = vmatprep.subr.mxu0 0.0
    %489 = vmatpush1.msra.mxu0 0.0
    %490 = vmatprep.subr.mxu0 0.0
    %491 = vmatpush1.msra.mxu0 0.0
    %492 = vmatprep.subr.mxu0 0.0
    %493 = vmatpush1.msra.mxu0 0.0
    %494 = vmatprep.subr.mxu0 0.0
    %495 = vmatpush1.msra.mxu0 0.0
    %496 = vmatprep.subr.mxu0 0.0
    %497 = vmatpush1.msra.mxu0 0.0
    %498 = vmatprep.subr.mxu0 0.0
    %499 = vmatpush1.msra.mxu0 0.0
    %500 = vmatprep.subr.mxu0 0.0
    %501 = vmatpush1.msra.mxu0 0.0
    %502 = vmatprep.subr.mxu0 0.0
    %503 = vmatpush1.msra.mxu0 0.0
    %504 = vmatprep.subr.mxu0 0.0
    %505 = vmatpush1.msra.mxu0 0.0
    %506 = vmatprep.subr.mxu0 0.0
    %507 = vmatpush1.msra.mxu0 0.0
    %508 = vmatprep.subr.mxu0 0.0
    %509 = vmatpush1.msra.mxu0 0.0
    %510 = vmatprep.subr.mxu0 0.0
    %511 = vmatpush1.msra.mxu0 0.0
    %512 = vmatprep.subr.mxu0 0.0
    %513 = vmatpush1.msra.mxu0 0.0
    %514 = vmatprep.subr.mxu0 0.0
    %515 = vmatpush1.msra.mxu0 0.0
    %516 = vmatprep.mubr.f32.mxu0 0.0
    %517 = vmatmul.mubr.f32.gmra.mrb[0].mxu0 %v450
    %v518 = vpop.f32.mrb[0].mxu0
    %v519 = vadd.f32 0.0, %v518
    %v520 = vpop.f32.mrb[0].mxu0
    %521 = vdwg.mxu0
    %v522 = vadd.f32 %v123, %v519
    %523 = vst.msk [vmem:[#allocation2 + $0xa] sm:$0x3] %vm131, %v522
    %v525 = vsel %vm133, %v522, 0
    %527 = vmatprep.subr.mxu0 0.0
    %528 = vmatpush1.msra.mxu0 %v126
    %529 = vmatprep.subr.mxu0 0.0
    %530 = vmatpush1.msra.mxu0 %v127
    %531 = vmatprep.subr.mxu0 0.0
    %532 = vmatpush1.msra.mxu0 %v128
    %533 = vmatprep.subr.mxu0 0.0
    %534 = vmatpush1.msra.mxu0 %v129
    %535 = vmatprep.subr.mxu0 0.0
    %536 = vmatpush1.msra.mxu0 0.0
    %537 = vmatprep.subr.mxu0 0.0
    %538 = vmatpush1.msra.mxu0 0.0
    %539 = vmatprep.subr.mxu0 0.0
    %540 = vmatpush1.msra.mxu0 0.0
    %541 = vmatprep.subr.mxu0 0.0
    %542 = vmatpush1.msra.mxu0 0.0
    %543 = vmatprep.subr.mxu0 0.0
    %544 = vmatpush1.msra.mxu0 0.0
    %545 = vmatprep.subr.mxu0 0.0
    %546 = vmatpush1.msra.mxu0 0.0
    %547 = vmatprep.subr.mxu0 0.0
    %548 = vmatpush1.msra.mxu0 0.0
    %549 = vmatprep.subr.mxu0 0.0
    %550 = vmatpush1.msra.mxu0 0.0
    %551 = vmatprep.subr.mxu0 0.0
    %552 = vmatpush1.msra.mxu0 0.0
    %553 = vmatprep.subr.mxu0 0.0
    %554 = vmatpush1.msra.mxu0 0.0
    %555 = vmatprep.subr.mxu0 0.0
    %556 = vmatpush1.msra.mxu0 0.0
    %557 = vmatprep.subr.mxu0 0.0
    %558 = vmatpush1.msra.mxu0 0.0
    %559 = vmatprep.subr.mxu0 0.0
    %560 = vmatpush1.msra.mxu0 0.0
    %561 = vmatprep.subr.mxu0 0.0
    %562 = vmatpush1.msra.mxu0 0.0
    %563 = vmatprep.subr.mxu0 0.0
    %564 = vmatpush1.msra.mxu0 0.0
    %565 = vmatprep.subr.mxu0 0.0
    %566 = vmatpush1.msra.mxu0 0.0
    %567 = vmatprep.subr.mxu0 0.0
    %568 = vmatpush1.msra.mxu0 0.0
    %569 = vmatprep.subr.mxu0 0.0
    %570 = vmatpush1.msra.mxu0 0.0
    %571 = vmatprep.subr.mxu0 0.0
    %572 = vmatpush1.msra.mxu0 0.0
    %573 = vmatprep.subr.mxu0 0.0
    %574 = vmatpush1.msra.mxu0 0.0
    %575 = vmatprep.subr.mxu0 0.0
    %576 = vmatpush1.msra.mxu0 0.0
    %577 = vmatprep.subr.mxu0 0.0
    %578 = vmatpush1.msra.mxu0 0.0
    %579 = vmatprep.subr.mxu0 0.0
    %580 = vmatpush1.msra.mxu0 0.0
    %581 = vmatprep.subr.mxu0 0.0
    %582 = vmatpush1.msra.mxu0 0.0
    %583 = vmatprep.subr.mxu0 0.0
    %584 = vmatpush1.msra.mxu0 0.0
    %585 = vmatprep.subr.mxu0 0.0
    %586 = vmatpush1.msra.mxu0 0.0
    %587 = vmatprep.subr.mxu0 0.0
    %588 = vmatpush1.msra.mxu0 0.0
    %589 = vmatprep.subr.mxu0 0.0
    %590 = vmatpush1.msra.mxu0 0.0
    %591 = vmatprep.mubr.f32.mxu0 0.0
    %592 = vmatmul.mubr.f32.gmra.mrb[0].mxu0 %v525
    %v593 = vpop.f32.mrb[0].mxu0
    %v594 = vadd.f32 0.0, %v593
    %v595 = vpop.f32.mrb[0].mxu0
    %596 = vdwg.mxu0
    %v598 = vrot.slane %v594, 6
    %v600 = vadd.f32 %v123, %v598
    %601 = vst.msk [vmem:[#allocation2 + $0xa] sm:$0xc] %vm286, %v600
    %v603 = vrot.slane %v600, 2
    %v604 = vsel %vm133, %v603, 0
    %606 = vmatprep.subr.mxu0 0.0
    %607 = vmatpush1.msra.mxu0 %v126
    %608 = vmatprep.subr.mxu0 0.0
    %609 = vmatpush1.msra.mxu0 %v127
    %610 = vmatprep.subr.mxu0 0.0
    %611 = vmatpush1.msra.mxu0 %v128
    %612 = vmatprep.subr.mxu0 0.0
    %613 = vmatpush1.msra.mxu0 %v129
    %614 = vmatprep.subr.mxu0 0.0
    %615 = vmatpush1.msra.mxu0 0.0
    %616 = vmatprep.subr.mxu0 0.0
    %617 = vmatpush1.msra.mxu0 0.0
    %618 = vmatprep.subr.mxu0 0.0
    %619 = vmatpush1.msra.mxu0 0.0
    %620 = vmatprep.subr.mxu0 0.0
    %621 = vmatpush1.msra.mxu0 0.0
    %622 = vmatprep.subr.mxu0 0.0
    %623 = vmatpush1.msra.mxu0 0.0
    %624 = vmatprep.subr.mxu0 0.0
    %625 = vmatpush1.msra.mxu0 0.0
    %626 = vmatprep.subr.mxu0 0.0
    %627 = vmatpush1.msra.mxu0 0.0
    %628 = vmatprep.subr.mxu0 0.0
    %629 = vmatpush1.msra.mxu0 0.0
    %630 = vmatprep.subr.mxu0 0.0
    %631 = vmatpush1.msra.mxu0 0.0
    %632 = vmatprep.subr.mxu0 0.0
    %633 = vmatpush1.msra.mxu0 0.0
    %634 = vmatprep.subr.mxu0 0.0
    %635 = vmatpush1.msra.mxu0 0.0
    %636 = vmatprep.subr.mxu0 0.0
    %637 = vmatpush1.msra.mxu0 0.0
    %638 = vmatprep.subr.mxu0 0.0
    %639 = vmatpush1.msra.mxu0 0.0
    %640 = vmatprep.subr.mxu0 0.0
    %641 = vmatpush1.msra.mxu0 0.0
    %642 = vmatprep.subr.mxu0 0.0
    %643 = vmatpush1.msra.mxu0 0.0
    %644 = vmatprep.subr.mxu0 0.0
    %645 = vmatpush1.msra.mxu0 0.0
    %646 = vmatprep.subr.mxu0 0.0
    %647 = vmatpush1.msra.mxu0 0.0
    %648 = vmatprep.subr.mxu0 0.0
    %649 = vmatpush1.msra.mxu0 0.0
    %650 = vmatprep.subr.mxu0 0.0
    %651 = vmatpush1.msra.mxu0 0.0
    %652 = vmatprep.subr.mxu0 0.0
    %653 = vmatpush1.msra.mxu0 0.0
    %654 = vmatprep.subr.mxu0 0.0
    %655 = vmatpush1.msra.mxu0 0.0
    %656 = vmatprep.subr.mxu0 0.0
    %657 = vmatpush1.msra.mxu0 0.0
    %658 = vmatprep.subr.mxu0 0.0
    %659 = vmatpush1.msra.mxu0 0.0
    %660 = vmatprep.subr.mxu0 0.0
    %661 = vmatpush1.msra.mxu0 0.0
    %662 = vmatprep.subr.mxu0 0.0
    %663 = vmatpush1.msra.mxu0 0.0
    %664 = vmatprep.subr.mxu0 0.0
    %665 = vmatpush1.msra.mxu0 0.0
    %666 = vmatprep.subr.mxu0 0.0
    %667 = vmatpush1.msra.mxu0 0.0
    %668 = vmatprep.subr.mxu0 0.0
    %669 = vmatpush1.msra.mxu0 0.0
    %670 = vmatprep.mubr.f32.mxu0 0.0
    %671 = vmatmul.mubr.f32.gmra.mrb[0].mxu0 %v604
    %v672 = vpop.f32.mrb[0].mxu0
    %v673 = vadd.f32 0.0, %v672
    %v674 = vpop.f32.mrb[0].mxu0
    %675 = vdwg.mxu0
    %v677 = vrot.slane %v673, 4
    %v679 = vadd.f32 %v123, %v677
    %680 = vst.msk [vmem:[#allocation2 + $0xa] sm:$0x30] %vm366, %v679
    %v682 = vrot.slane %v679, 4
    %v683 = vsel %vm133, %v682, 0
    %685 = vmatprep.subr.mxu0 0.0
    %686 = vmatpush1.msra.mxu0 %v126
    %687 = vmatprep.subr.mxu0 0.0
    %688 = vmatpush1.msra.mxu0 %v127
    %689 = vmatprep.subr.mxu0 0.0
    %690 = vmatpush1.msra.mxu0 %v128
    %691 = vmatprep.subr.mxu0 0.0
    %692 = vmatpush1.msra.mxu0 %v129
    %693 = vmatprep.subr.mxu0 0.0
    %694 = vmatpush1.msra.mxu0 0.0
    %695 = vmatprep.subr.mxu0 0.0
    %696 = vmatpush1.msra.mxu0 0.0
    %697 = vmatprep.subr.mxu0 0.0
    %698 = vmatpush1.msra.mxu0 0.0
    %699 = vmatprep.subr.mxu0 0.0
    %700 = vmatpush1.msra.mxu0 0.0
    %701 = vmatprep.subr.mxu0 0.0
    %702 = vmatpush1.msra.mxu0 0.0
    %703 = vmatprep.subr.mxu0 0.0
    %704 = vmatpush1.msra.mxu0 0.0
    %705 = vmatprep.subr.mxu0 0.0
    %706 = vmatpush1.msra.mxu0 0.0
    %707 = vmatprep.subr.mxu0 0.0
    %708 = vmatpush1.msra.mxu0 0.0
    %709 = vmatprep.subr.mxu0 0.0
    %710 = vmatpush1.msra.mxu0 0.0
    %711 = vmatprep.subr.mxu0 0.0
    %712 = vmatpush1.msra.mxu0 0.0
    %713 = vmatprep.subr.mxu0 0.0
    %714 = vmatpush1.msra.mxu0 0.0
    %715 = vmatprep.subr.mxu0 0.0
    %716 = vmatpush1.msra.mxu0 0.0
    %717 = vmatprep.subr.mxu0 0.0
    %718 = vmatpush1.msra.mxu0 0.0
    %719 = vmatprep.subr.mxu0 0.0
    %720 = vmatpush1.msra.mxu0 0.0
    %721 = vmatprep.subr.mxu0 0.0
    %722 = vmatpush1.msra.mxu0 0.0
    %723 = vmatprep.subr.mxu0 0.0
    %724 = vmatpush1.msra.mxu0 0.0
    %725 = vmatprep.subr.mxu0 0.0
    %726 = vmatpush1.msra.mxu0 0.0
    %727 = vmatprep.subr.mxu0 0.0
    %728 = vmatpush1.msra.mxu0 0.0
    %729 = vmatprep.subr.mxu0 0.0
    %730 = vmatpush1.msra.mxu0 0.0
    %731 = vmatprep.subr.mxu0 0.0
    %732 = vmatpush1.msra.mxu0 0.0
    %733 = vmatprep.subr.mxu0 0.0
    %734 = vmatpush1.msra.mxu0 0.0
    %735 = vmatprep.subr.mxu0 0.0
    %736 = vmatpush1.msra.mxu0 0.0
    %737 = vmatprep.subr.mxu0 0.0
    %738 = vmatpush1.msra.mxu0 0.0
    %739 = vmatprep.subr.mxu0 0.0
    %740 = vmatpush1.msra.mxu0 0.0
    %741 = vmatprep.subr.mxu0 0.0
    %742 = vmatpush1.msra.mxu0 0.0
    %743 = vmatprep.subr.mxu0 0.0
    %744 = vmatpush1.msra.mxu0 0.0
    %745 = vmatprep.subr.mxu0 0.0
    %746 = vmatpush1.msra.mxu0 0.0
    %747 = vmatprep.subr.mxu0 0.0
    %748 = vmatpush1.msra.mxu0 0.0
    %749 = vmatprep.mubr.f32.mxu0 0.0
    %750 = vmatmul.mubr.f32.gmra.mrb[0].mxu0 %v683
    %v751 = vpop.f32.mrb[0].mxu0
    %v752 = vadd.f32 0.0, %v751
    %v753 = vpop.f32.mrb[0].mxu0
    %754 = vdwg.mxu0
    %v756 = vrot.slane %v752, 2
    %v758 = vadd.f32 %v123, %v756
    %759 = vst.msk [vmem:[#allocation5 - $0x6] sm:$0xc0] %vm446, %v758
    %v760 = vld [vmem:[%s4] sm:$0xff]
    %v761 = vld [vmem:[%s4 + $0x8] sm:$0xff]
    %v762 = vld [vmem:[#allocation2] sm:$0xff]
    %v763 = vld [vmem:[#allocation2 + $0x8] sm:$0xff]
    %v764 = vld [vmem:[%s5] sm:$0xff]
    %v765 = vld [vmem:[%s5 + $0x8] sm:$0xff]
    %v766 = vld [vmem:[%s5 + $0x10] sm:$0xff]
    %v767 = vld [vmem:[%s5 + $0x18] sm:$0xff]
    %v769 = vsel %vm133, %v762, 0
    %v772 = vsel %vm133, %v763, 0
    %774 = vmatprep.subr.mxu0 0.0
    %775 = vmatpush1.msra.mxu0 %v764
    %776 = vmatprep.subr.mxu0 0.0
    %777 = vmatpush1.msra.mxu0 %v765
    %778 = vmatprep.subr.mxu0 0.0
    %779 = vmatpush1.msra.mxu0 %v766
    %780 = vmatprep.subr.mxu0 0.0
    %781 = vmatpush1.msra.mxu0 %v767
    %782 = vmatprep.subr.mxu0 0.0
    %783 = vmatpush1.msra.mxu0 0.0
    %784 = vmatprep.subr.mxu0 0.0
    %785 = vmatpush1.msra.mxu0 0.0
    %786 = vmatprep.subr.mxu0 0.0
    %787 = vmatpush1.msra.mxu0 0.0
    %788 = vmatprep.subr.mxu0 0.0
    %789 = vmatpush1.msra.mxu0 0.0
    %790 = vmatprep.subr.mxu0 0.0
    %791 = vmatpush1.msra.mxu0 0.0
    %792 = vmatprep.subr.mxu0 0.0
    %793 = vmatpush1.msra.mxu0 0.0
    %794 = vmatprep.subr.mxu0 0.0
    %795 = vmatpush1.msra.mxu0 0.0
    %796 = vmatprep.subr.mxu0 0.0
    %797 = vmatpush1.msra.mxu0 0.0
    %798 = vmatprep.subr.mxu0 0.0
    %799 = vmatpush1.msra.mxu0 0.0
    %800 = vmatprep.subr.mxu0 0.0
    %801 = vmatpush1.msra.mxu0 0.0
    %802 = vmatprep.subr.mxu0 0.0
    %803 = vmatpush1.msra.mxu0 0.0
    %804 = vmatprep.subr.mxu0 0.0
    %805 = vmatpush1.msra.mxu0 0.0
    %806 = vmatprep.subr.mxu0 0.0
    %807 = vmatpush1.msra.mxu0 0.0
    %808 = vmatprep.subr.mxu0 0.0
    %809 = vmatpush1.msra.mxu0 0.0
    %810 = vmatprep.subr.mxu0 0.0
    %811 = vmatpush1.msra.mxu0 0.0
    %812 = vmatprep.subr.mxu0 0.0
    %813 = vmatpush1.msra.mxu0 0.0
    %814 = vmatprep.subr.mxu0 0.0
    %815 = vmatpush1.msra.mxu0 0.0
    %816 = vmatprep.subr.mxu0 0.0
    %817 = vmatpush1.msra.mxu0 0.0
    %818 = vmatprep.subr.mxu0 0.0
    %819 = vmatpush1.msra.mxu0 0.0
    %820 = vmatprep.subr.mxu0 0.0
    %821 = vmatpush1.msra.mxu0 0.0
    %822 = vmatprep.subr.mxu0 0.0
    %823 = vmatpush1.msra.mxu0 0.0
    %824 = vmatprep.subr.mxu0 0.0
    %825 = vmatpush1.msra.mxu0 0.0
    %826 = vmatprep.subr.mxu0 0.0
    %827 = vmatpush1.msra.mxu0 0.0
    %828 = vmatprep.subr.mxu0 0.0
    %829 = vmatpush1.msra.mxu0 0.0
    %830 = vmatprep.subr.mxu0 0.0
    %831 = vmatpush1.msra.mxu0 0.0
    %832 = vmatprep.subr.mxu0 0.0
    %833 = vmatpush1.msra.mxu0 0.0
    %834 = vmatprep.subr.mxu0 0.0
    %835 = vmatpush1.msra.mxu0 0.0
    %836 = vmatprep.subr.mxu0 0.0
    %837 = vmatpush1.msra.mxu0 0.0
    %838 = vmatprep.mubr.f32.mxu0 0.0
    %839 = vmatmul.mubr.f32.gmra.mrb[0].mxu0 %v769
    %v840 = vpop.f32.mrb[0].mxu0
    %v841 = vadd.f32 0.0, %v840
    %v842 = vpop.f32.mrb[0].mxu0
    %843 = vmatprep.mubr.f32.mxu0 0.0
    %844 = vmatmul.mubr.f32.gmra.mrb[0].mxu0 %v772
    %v845 = vpop.f32.mrb[0].mxu0
    %v846 = vadd.f32 0.0, %v845
    %v847 = vpop.f32.mrb[0].mxu0
    %848 = vdwg.mxu0
    %849 = vmatprep.subr.mxu0 0.0
    %850 = vmatpush1.msra.mxu0 %v760
    %851 = vmatprep.subr.mxu0 0.0
    %852 = vmatpush1.msra.mxu0 %v761
    %853 = vmatprep.subr.mxu0 0.0
    %854 = vmatpush1.msra.mxu0 0.0
    %855 = vmatprep.subr.mxu0 0.0
    %856 = vmatpush1.msra.mxu0 0.0
    %857 = vmatprep.subr.mxu0 0.0
    %858 = vmatpush1.msra.mxu0 0.0
    %859 = vmatprep.subr.mxu0 0.0
    %860 = vmatpush1.msra.mxu0 0.0
    %861 = vmatprep.subr.mxu0 0.0
    %862 = vmatpush1.msra.mxu0 0.0
    %863 = vmatprep.subr.mxu0 0.0
    %864 = vmatpush1.msra.mxu0 0.0
    %865 = vmatprep.subr.mxu0 0.0
    %866 = vmatpush1.msra.mxu0 0.0
    %867 = vmatprep.subr.mxu0 0.0
    %868 = vmatpush1.msra.mxu0 0.0
    %869 = vmatprep.subr.mxu0 0.0
    %870 = vmatpush1.msra.mxu0 0.0
    %871 = vmatprep.subr.mxu0 0.0
    %872 = vmatpush1.msra.mxu0 0.0
    %873 = vmatprep.subr.mxu0 0.0
    %874 = vmatpush1.msra.mxu0 0.0
    %875 = vmatprep.subr.mxu0 0.0
    %876 = vmatpush1.msra.mxu0 0.0
    %877 = vmatprep.subr.mxu0 0.0
    %878 = vmatpush1.msra.mxu0 0.0
    %879 = vmatprep.subr.mxu0 0.0
    %880 = vmatpush1.msra.mxu0 0.0
    %881 = vmatprep.subr.mxu0 0.0
    %882 = vmatpush1.msra.mxu0 0.0
    %883 = vmatprep.subr.mxu0 0.0
    %884 = vmatpush1.msra.mxu0 0.0
    %885 = vmatprep.subr.mxu0 0.0
    %886 = vmatpush1.msra.mxu0 0.0
    %887 = vmatprep.subr.mxu0 0.0
    %888 = vmatpush1.msra.mxu0 0.0
    %889 = vmatprep.subr.mxu0 0.0
    %890 = vmatpush1.msra.mxu0 0.0
    %891 = vmatprep.subr.mxu0 0.0
    %892 = vmatpush1.msra.mxu0 0.0
    %893 = vmatprep.subr.mxu0 0.0
    %894 = vmatpush1.msra.mxu0 0.0
    %895 = vmatprep.subr.mxu0 0.0
    %896 = vmatpush1.msra.mxu0 0.0
    %897 = vmatprep.subr.mxu0 0.0
    %898 = vmatpush1.msra.mxu0 0.0
    %899 = vmatprep.subr.mxu0 0.0
    %900 = vmatpush1.msra.mxu0 0.0
    %901 = vmatprep.subr.mxu0 0.0
    %902 = vmatpush1.msra.mxu0 0.0
    %903 = vmatprep.subr.mxu0 0.0
    %904 = vmatpush1.msra.mxu0 0.0
    %905 = vmatprep.subr.mxu0 0.0
    %906 = vmatpush1.msra.mxu0 0.0
    %907 = vmatprep.subr.mxu0 0.0
    %908 = vmatpush1.msra.mxu0 0.0
    %909 = vmatprep.subr.mxu0 0.0
    %910 = vmatpush1.msra.mxu0 0.0
    %911 = vmatprep.subr.mxu0 0.0
    %912 = vmatpush1.msra.mxu0 0.0
    %913 = vmatprep.mubr.f32.mxu0 0.0
    %914 = vmatmul.mubr.f32.gmra.mrb[0].mxu0 %v46
    %v915 = vpop.f32.mrb[0].mxu0
    %v916 = vadd.f32 %v841, %v915
    %v917 = vpop.f32.mrb[0].mxu0
    %918 = vmatprep.mubr.f32.mxu0 0.0
    %919 = vmatmul.mubr.f32.gmra.mrb[0].mxu0 %v49
    %v920 = vpop.f32.mrb[0].mxu0
    %v921 = vadd.f32 %v846, %v920
    %v922 = vpop.f32.mrb[0].mxu0
    %923 = vdwg.mxu0
    %v924 = vld [vmem:[%s7] sm:$0x1]
    %v926 = vlaneseq
    %v927 = vshrl.u32 %v926, 7
    %v928 = vsub.s32 0, %v927
    %v929 = vrot.slane %v924, %v928
    %v931 = vadd.f32 %v916, %v929
    %v932 = vadd.f32 %v921, %v929
    %vm933 = vcmask 64512
    %v934 = vsel %vm933, %v931, -inf
    %935 = vmax.xlane.f32.xlu0 %v934
    %v936 = vpop.xlane.xlu0 %935
    %v937 = vsel %vm933, %v932, -inf
    %938 = vmax.xlane.f32.xlu0 %v937
    %v939 = vpop.xlane.xlu0 %938
    %v940 = vsub.f32 %v931, %v936
    %v941 = vsub.f32 %v932, %v939
    %v942 = vmul.f32 %v940, 1.442695
    %v943 = vpow.pop %v942
    %v944 = vmul.f32 %v941, 1.442695
    %v945 = vpow.pop %v944
    %v946 = vsel %vm933, %v943, 0.0
    %947 = vadd.xlane.f32.xlu0 %v946
    %v948 = vpop.xlane.xlu0 %947
    %v949 = vsel %vm933, %v945, 0.0
    %950 = vadd.xlane.f32.xlu0 %v949
    %v951 = vpop.xlane.xlu0 %950
    %v952 = vlog2.pop %v948
    %v953 = vmul.f32 %v952, 0.6931472
    %v954 = vlog2.pop %v951
    %v955 = vmul.f32 %v954, 0.6931472
    %v956 = vadd.f32 %v936, %v953
    %v957 = vadd.f32 %v939, %v955
    %v958 = vsub.f32 %v931, %v956
    %v959 = vsub.f32 %v932, %v957
    %960 = vst.msk [vmem:[#allocation3] sm:$0xff] %vm933, %v958
    %961 = vst.msk [vmem:[#allocation3 + $0x8] sm:$0xff] %vm933, %v959
    // Predicated region
    $region34: #{rnn_forward_sequence.1} parent=1 // pred_check
      _
    $region35: #{rnn_forward_sequence.1} parent=1 // pred_check_branch
      %963 = sbr.rel (0) target = $region37
    $region36: #{rnn_forward_sequence.1} parent=1 // pred_region
      %s965 = ssub.s32 256, 256
      %966 = vsyncadd [#allocation4], %s965
      %s967 = sshll.u32 [#allocation3], 4
      %s968 = int_to_ptr.vmem [resolvable:$true] %s967
      %973 = dma.vmem_to_hbm [thread:$0]  %s968, 256, %s8, [#allocation4], 128, 128, 8
    $region37: #{rnn_forward_sequence.1} parent=1 // pred_fallthru
      _
    // Predicated region
    $region38: #{rnn_forward_sequence.1} parent=1 // pred_check
      _
    $region39: #{rnn_forward_sequence.1} parent=1 // pred_check_branch
      %975 = sbr.rel (0) target = $region41
    $region40: #{rnn_forward_sequence.1} parent=1 // pred_region
      %s977 = ssub.s32 32, 32
      %978 = vsyncadd [#allocation6], %s977
      %s980 = sshll.u32 [#allocation5], 4
      %s981 = int_to_ptr.vmem [resolvable:$true] %s980
      %983 = dma.vmem_to_hbm [thread:$0]  %s981, 32, %s9, [#allocation6]
    $region41: #{rnn_forward_sequence.1} parent=1 // pred_fallthru
      _
    // Predicated region
    $region42: #{rnn_forward_sequence.1} parent=1 // pred_check
      _
    $region43: #{rnn_forward_sequence.1} parent=1 // pred_check_branch
      %985 = sbr.rel (0) target = $region45
    $region44: #{rnn_forward_sequence.1} parent=1 // pred_region
      %986 = dma.done [#allocation4], 256
    $region45: #{rnn_forward_sequence.1} parent=1 // pred_fallthru
      _
    // Predicated region
    $region46: #{rnn_forward_sequence.1} parent=1 // pred_check
      _
    $region47: #{rnn_forward_sequence.1} parent=1 // pred_check_branch
      %988 = sbr.rel (0) target = $region49
    $region48: #{rnn_forward_sequence.1} parent=1 // pred_region
      %989 = dma.done [#allocation6], 32
    $region49: #{rnn_forward_sequence.1} parent=1 // pred_fallthru
      _
    %990 = vsyncpa [#allocation4], 1
    %991 = vsyncpa [#allocation6], 1

</llo_original>
